<compile_context>
chip_gen: v7x
topology: tpu7x:2x2x1
jax: 0.10.0
libtpu: 0.0.40
codegen_flags: <defaults>
</compile_context>

<pallas_src>
import functools

import jax
import jax.numpy as jnp
from jax.experimental import pallas as pl
from jax.experimental.pallas import tpu as pltpu

_EPS = 1e-5


# --------------------------------------------------------------------------- #
# helpers
# --------------------------------------------------------------------------- #

def _seq_tile(S, target):
    """Largest tile <= target that divides S and is a multiple of 8 (else S)."""
    if S <= target:
        return S
    for t in range(min(target, S), 7, -1):
        if S % t == 0 and t % 8 == 0:
            return t
    return S


def _vmem_limit_bytes(streamed_bytes, resident_bytes, temp_bytes):
    """Scoped-VMEM limit derived from actual block residency (2x for pipelined
    blocks; weights also counted 2x in case single-buffering fell back), plus
    headroom for Mosaic internal scratch; capped 16 MiB below physical capacity."""
    try:
        cap = int(pltpu.get_tpu_info().vmem_capacity_bytes)
    except Exception:
        cap = 64 * 1024 * 1024
    need = (2 * int(streamed_bytes) + 2 * int(resident_bytes)
            + int(temp_bytes) + (8 << 20))
    return int(max(32 << 20, min(need, cap - (16 << 20))))


@functools.lru_cache(maxsize=None)
def _weight_pipeline_kwargs():
    """BlockSpec kwargs that single-buffer constant-index weight blocks.

    Weights/biases/LN params keep the same block index for every grid step, so
    default double-buffering only doubles their VMEM residency.  Probe
    pl.Buffered(1) once on a tiny kernel; fall back to default pipelining if
    this Pallas build rejects it."""
    def probe(x_ref, w_ref, o_ref):
        o_ref[...] = x_ref[...] + w_ref[...]

    try:
        z = jnp.zeros((8, 128), jnp.float32)
        out = pl.pallas_call(
            probe,
            out_shape=jax.ShapeDtypeStruct((8, 128), jnp.float32),
            grid=(2,),
            in_specs=[pl.BlockSpec((8, 128), lambda i: (0, 0)),
                      pl.BlockSpec((8, 128), lambda i: (0, 0),
                                   pipeline_mode=pl.Buffered(1))],
            out_specs=pl.BlockSpec((8, 128), lambda i: (0, 0)),
        )(z, z)
        jax.block_until_ready(out)
        return {"pipeline_mode": pl.Buffered(1)}
    except Exception:
        return {}


def _const_spec(shape, grid_rank, wkw):
    """Whole-array block whose index never changes across the grid."""
    zeros = (0,) * len(shape)
    if grid_rank == 2:
        imap = lambda i, j: zeros
    else:
        imap = lambda i, j, k: zeros
    return pl.BlockSpec(shape, imap, **wkw)


def _layernorm(x, gamma, beta):
    # centered two-pass variance (closer to torch.nn.LayerNorm than E[x^2]-mu^2);
    # all elementwise math kept in f32 (v5e has no bf16 VPU/EUP path).
    mu = jnp.mean(x, axis=-1, keepdims=True)
    xc = x - mu
    var = jnp.mean(xc * xc, axis=-1, keepdims=True)
    return xc * jax.lax.rsqrt(var + _EPS) * gamma + beta


# --------------------------------------------------------------------------- #
# kernel 1: LayerNorm1 + QKV projection
# --------------------------------------------------------------------------- #

def _qkv_kernel(x_ref, g_ref, b_ref, w_qkv_ref, q_ref, k_ref, v_ref,
                *, heads, dim_head):
    inner = heads * dim_head
    xn = _layernorm(x_ref[0].astype(jnp.float32), g_ref[0], b_ref[0])   # (TS, D)
    # one MXU matmul: full contraction depth D, output width 3*inner
    qkv = jnp.dot(xn.astype(jnp.bfloat16), w_qkv_ref[...],
                  preferred_element_type=jnp.float32)                    # (TS, 3*inner)
    scale = dim_head ** -0.5
    # per-head stores into the (heads, S, dh) HBM layout; these lane slices are
    # free when dim_head is a multiple of 128 (relayout copies otherwise).
    for h in range(heads):
        lo = h * dim_head
        q_ref[0, h, :, :] = (qkv[:, lo:lo + dim_head] * scale).astype(jnp.bfloat16)
        k_ref[0, h, :, :] = qkv[:, inner + lo:inner + lo + dim_head].astype(jnp.bfloat16)
        v_ref[0, h, :, :] = qkv[:, 2 * inner + lo:2 * inner + lo + dim_head].astype(jnp.bfloat16)


def qkv_projection(x, ln_g, ln_b, w_qkv, *, heads, dim_head):
    B, S, D = x.shape
    inner = heads * dim_head
    TS = _seq_tile(S, 256)
    wkw = _weight_pipeline_kwargs()
    kern = functools.partial(_qkv_kernel, heads=heads, dim_head=dim_head)
    out_sds = jax.ShapeDtypeStruct((B, heads, S, dim_head), jnp.bfloat16)

    streamed = TS * D * x.dtype.itemsize + 3 * heads * TS * dim_head * 2
    resident = D * 3 * inner * 2 + 2 * D * 4
    temp = 4 * TS * (D + 3 * inner) * 4

    return pl.pallas_call(
        kern,
        out_shape=(out_sds, out_sds, out_sds),
        grid=(B, S // TS),
        in_specs=[
            pl.BlockSpec((1, TS, D), lambda b, s: (b, s, 0)),
            _const_spec((1, D), 2, wkw),
            _const_spec((1, D), 2, wkw),
            _const_spec((D, 3 * inner), 2, wkw),
        ],
        out_specs=[pl.BlockSpec((1, heads, TS, dim_head),
                                lambda b, s: (b, 0, s, 0))] * 3,
        compiler_params=pltpu.CompilerParams(
            dimension_semantics=("parallel", "parallel"),
            vmem_limit_bytes=_vmem_limit_bytes(streamed, resident, temp),
        ),
        cost_estimate=pl.CostEstimate(
            flops=int(2 * B * S * D * 3 * inner),
            transcendentals=int(B * S),
            bytes_accessed=int(B * S * D * x.dtype.itemsize
                               + 3 * B * S * inner * 2 + D * 3 * inner * 2),
        ),
    )(x, ln_g, ln_b, w_qkv)


# --------------------------------------------------------------------------- #
# kernel 2: flash attention + output projection + residual
# --------------------------------------------------------------------------- #

def _flash_attn_kernel(q_ref, k_ref, v_ref, x_ref, w_out_ref, b_out_ref, o_ref,
                       m_sc, l_sc, acc_sc):
    ki = pl.program_id(2)

    @pl.when(ki == 0)
    def _():
        m_sc[...] = jnp.full(m_sc.shape, -jnp.inf, jnp.float32)
        l_sc[...] = jnp.zeros(l_sc.shape, jnp.float32)
        acc_sc[...] = jnp.zeros(acc_sc.shape, jnp.float32)

    qh = q_ref[0]                                   # (heads, TQ, dh) bf16, pre-scaled
    kh = k_ref[0]                                   # (heads, TK, dh) bf16
    vh = v_ref[0]

    s = jnp.einsum('hqd,hkd->hqk', qh, kh,
                   preferred_element_type=jnp.float32)           # (heads, TQ, TK)
    m_new = jnp.maximum(m_sc[...], jnp.max(s, axis=-1, keepdims=True))
    alpha = jnp.exp(m_sc[...] - m_new)
    p = jnp.exp(s - m_new)
    l_sc[...] = alpha * l_sc[...] + jnp.sum(p, axis=-1, keepdims=True)
    acc_sc[...] = alpha * acc_sc[...] + jnp.einsum(
        'hqk,hkd->hqd', p.astype(jnp.bfloat16), vh,
        preferred_element_type=jnp.float32)
    m_sc[...] = m_new

    @pl.when(ki == pl.num_programs(2) - 1)
    def _():
        o_h = (acc_sc[...] * pl.reciprocal(l_sc[...], approx=True)
               ).astype(jnp.bfloat16)                            # (heads, TQ, dh)
        # per-head partial output projections on the MXU, summed on the VPU:
        # no head-merge transpose and no (S, inner) activation relayout.
        proj = jnp.einsum('hqd,hdn->hqn', o_h, w_out_ref[...],
                          preferred_element_type=jnp.float32)    # (heads, TQ, D)
        attn = jnp.sum(proj, axis=0) + b_out_ref[0]
        o_ref[0] = (x_ref[0].astype(jnp.float32) + attn).astype(o_ref.dtype)


def flash_attention(q, k, v, x_res, w_out, b_out, *, out_dtype=jnp.bfloat16):
    B, heads, S, dh = q.shape
    D = x_res.shape[-1]
    TQ = _seq_tile(S, 256)
    TK = _seq_tile(S, 512)
    nq, nk = S // TQ, S // TK
    wkw = _weight_pipeline_kwargs()

    streamed = (heads * TQ * dh * 2 + 2 * heads * TK * dh * 2
                + TQ * D * x_res.dtype.itemsize
                + TQ * D * jnp.dtype(out_dtype).itemsize)
    resident = heads * dh * D * 2 + D * 4
    scratch = heads * TQ * (dh + 2) * 4
    temp = scratch + 3 * heads * TQ * TK * 4 + heads * TQ * D * 4

    return pl.pallas_call(
        _flash_attn_kernel,
        out_shape=jax.ShapeDtypeStruct((B, S, D), out_dtype),
        grid=(B, nq, nk),
        in_specs=[
            pl.BlockSpec((1, heads, TQ, dh), lambda b, qi, ki: (b, 0, qi, 0)),
            pl.BlockSpec((1, heads, TK, dh), lambda b, qi, ki: (b, 0, ki, 0)),
            pl.BlockSpec((1, heads, TK, dh), lambda b, qi, ki: (b, 0, ki, 0)),
            pl.BlockSpec((1, TQ, D), lambda b, qi, ki: (b, qi, 0)),
            _const_spec((heads, dh, D), 3, wkw),
            _const_spec((1, D), 3, wkw),
        ],
        out_specs=pl.BlockSpec((1, TQ, D), lambda b, qi, ki: (b, qi, 0)),
        scratch_shapes=[
            pltpu.VMEM((heads, TQ, 1), jnp.float32),   # m  (running max)
            pltpu.VMEM((heads, TQ, 1), jnp.float32),   # l  (running denominator)
            pltpu.VMEM((heads, TQ, dh), jnp.float32),  # acc (running numerator)
        ],
        compiler_params=pltpu.CompilerParams(
            dimension_semantics=("parallel", "parallel", "arbitrary"),
            vmem_limit_bytes=_vmem_limit_bytes(streamed, resident, temp),
        ),
        cost_estimate=pl.CostEstimate(
            flops=int(4 * B * heads * S * S * dh + 2 * B * S * heads * dh * D),
            transcendentals=int(B * heads * S * S),
            bytes_accessed=int(B * heads * S * dh * 2 * (1 + 2 * nq)
                               + 2 * B * S * D * 2 + heads * dh * D * 2),
        ),
    )(q, k, v, x_res, w_out, b_out)


# --------------------------------------------------------------------------- #
# kernel 3: LayerNorm2 + FeedForward(GELU) + residual
# --------------------------------------------------------------------------- #

def _ffn_kernel(x_ref, g_ref, b_ref, w1_ref, b1_ref, w2_ref, b2_ref, o_ref):
    x = x_ref[0].astype(jnp.float32)                              # (TS, D)
    xn = _layernorm(x, g_ref[0], b_ref[0])
    h1 = jnp.dot(xn.astype(jnp.bfloat16), w1_ref[...],
                 preferred_element_type=jnp.float32) + b1_ref[0]
    h1 = jax.nn.gelu(h1, approximate=False)        # matches torch.nn.GELU (erf)
    y = jnp.dot(h1.astype(jnp.bfloat16), w2_ref[...],
                preferred_element_type=jnp.float32) + b2_ref[0]
    o_ref[0] = (x + y).astype(o_ref.dtype)


def feed_forward(x, ln_g, ln_b, w1, b1, w2, b2, *, out_dtype=None):
    B, S, D = x.shape
    H = w1.shape[1]
    if out_dtype is None:
        out_dtype = x.dtype
    TS = _seq_tile(S, 256)
    wkw = _weight_pipeline_kwargs()

    streamed = TS * D * (x.dtype.itemsize + jnp.dtype(out_dtype).itemsize)
    resident = (D * H + H * D) * 2 + (H + 3 * D) * 4
    temp = 2 * TS * H * 4 + 4 * TS * D * 4

    return pl.pallas_call(
        _ffn_kernel,
        out_shape=jax.ShapeDtypeStruct((B, S, D), out_dtype),
        grid=(B, S // TS),
        in_specs=[
            pl.BlockSpec((1, TS, D), lambda b, s: (b, s, 0)),
            _const_spec((1, D), 2, wkw),
            _const_spec((1, D), 2, wkw),
            _const_spec((D, H), 2, wkw),
            _const_spec((1, H), 2, wkw),
            _const_spec((H, D), 2, wkw),
            _const_spec((1, D), 2, wkw),
        ],
        out_specs=pl.BlockSpec((1, TS, D), lambda b, s: (b, s, 0)),
        compiler_params=pltpu.CompilerParams(
            dimension_semantics=("parallel", "parallel"),
            vmem_limit_bytes=_vmem_limit_bytes(streamed, resident, temp),
        ),
        cost_estimate=pl.CostEstimate(
            flops=int(4 * B * S * D * H),
            transcendentals=int(B * S * H + B * S),
            bytes_accessed=int(B * S * D * (x.dtype.itemsize
                                            + jnp.dtype(out_dtype).itemsize)
                               + 2 * D * H * 2),
        ),
    )(x, ln_g, ln_b, w1, b1, w2, b2)


# --------------------------------------------------------------------------- #
# layer / model wiring
# --------------------------------------------------------------------------- #

def transformer_layer(x, p, *, heads, dim_head, out_dtype=None):
    if out_dtype is None:
        out_dtype = x.dtype
    q, k, v = qkv_projection(x, p["ln1_g"], p["ln1_b"], p["w_qkv"],
                             heads=heads, dim_head=dim_head)
    x = flash_attention(q, k, v, x, p["w_out"], p["b_out"],
                        out_dtype=jnp.bfloat16)            # x = attn(LN(x)) + x
    x = feed_forward(x, p["ln2_g"], p["ln2_b"], p["w_ff1"], p["b_ff1"],
                     p["w_ff2"], p["b_ff2"], out_dtype=out_dtype)  # x = ffn(LN(x)) + x
    return x


def transformer_forward(x, layers, *, heads, dim_head):
    # dropout=0.0 -> identity (inference); residual wiring matches the PyTorch forward.
    # Inter-layer activations are kept bf16; final layer restores the input dtype.
    out_dtype = x.dtype
    n = len(layers)
    for i, p in enumerate(layers):
        layer_dtype = out_dtype if i == n - 1 else jnp.bfloat16
        x = transformer_layer(x, p, heads=heads, dim_head=dim_head,
                              out_dtype=layer_dtype)
    return x


def init_params(key, *, input_dim, n_layers, heads, dim_head, mlp_dim):
    inner = heads * dim_head
    layers = []
    for _ in range(n_layers):
        keys = jax.random.split(key, 7)
        key = keys[0]
        layers.append(dict(
            ln1_g=jnp.ones((1, input_dim), jnp.float32),
            ln1_b=jnp.zeros((1, input_dim), jnp.float32),
            # matmul weights stored bf16 (MXU-native, halves HBM/VMEM traffic);
            # w_qkv column order is [q | k | v], head-major within each chunk.
            w_qkv=(0.05 * jax.random.normal(keys[1], (input_dim, 3 * inner),
                                            jnp.float32)).astype(jnp.bfloat16),
            # output projection stored pre-split per head: (heads, dh, D)
            w_out=(0.05 * jax.random.normal(keys[2], (heads, dim_head, input_dim),
                                            jnp.float32)).astype(jnp.bfloat16),
            b_out=0.05 * jax.random.normal(keys[3], (1, input_dim), jnp.float32),
            ln2_g=jnp.ones((1, input_dim), jnp.float32),
            ln2_b=jnp.zeros((1, input_dim), jnp.float32),
            w_ff1=(0.05 * jax.random.normal(keys[4], (input_dim, mlp_dim),
                                            jnp.float32)).astype(jnp.bfloat16),
            b_ff1=jnp.zeros((1, mlp_dim), jnp.float32),
            w_ff2=(0.05 * jax.random.normal(keys[5], (mlp_dim, input_dim),
                                            jnp.float32)).astype(jnp.bfloat16),
            b_ff2=jnp.zeros((1, input_dim), jnp.float32),
        ))
    return layers


if __name__ == "__main__":
    B, S = 2, 8
    input_dim, n_layers, heads, dim_head, mlp_dim = 32, 2, 4, 8, 64

    key = jax.random.PRNGKey(0)
    kx, kp = jax.random.split(key)
    x = jax.random.normal(kx, (B, S, input_dim), jnp.float32)
    layers = init_params(kp, input_dim=input_dim, n_layers=n_layers,
                         heads=heads, dim_head=dim_head, mlp_dim=mlp_dim)

    out = transformer_forward(x, layers, heads=heads, dim_head=dim_head)
    out = jax.block_until_ready(out)
    assert out.shape == (B, S, input_dim)
    assert out.dtype == x.dtype
    print("KERNEL_OK")
</pallas_src>

<mosaic_0001>
module attributes {stable_mosaic.version = 11 : i64} {
  func.func @probe(%arg0: i32, %arg1: memref<8x128xf32, #tpu.memory_space<vmem>>, %arg2: memref<8x128xf32, #tpu.memory_space<vmem>>, %arg3: memref<8x128xf32, #tpu.memory_space<vmem>>) attributes {dimension_semantics = [#tpu.dimension_semantics<arbitrary>], iteration_bounds = array<i64: 2>, scalar_prefetch = 0 : i64, scratch_operands = 0 : i64, tpu.core_type = #tpu.core_type<tc>, window_params = [{pipeline_mode = #tpu.pipeline_mode<synchronous>, transform_indices = @transform_0, window_bounds = array<i64: 8, 128>}, {pipeline_mode = #tpu.pipeline_mode<synchronous>, transform_indices = @transform_1, window_bounds = array<i64: 8, 128>}, {pipeline_mode = #tpu.pipeline_mode<synchronous>, transform_indices = @transform_2, window_bounds = array<i64: 8, 128>}]} {
    %c0 = arith.constant 0 : index
    %c0_0 = arith.constant 0 : index
    %0 = vector.load %arg1[%c0, %c0_0] : memref<8x128xf32, #tpu.memory_space<vmem>>, vector<8x128xf32>
    %c0_1 = arith.constant 0 : index
    %c0_2 = arith.constant 0 : index
    %1 = vector.load %arg2[%c0_1, %c0_2] : memref<8x128xf32, #tpu.memory_space<vmem>>, vector<8x128xf32>
    %2 = arith.addf %0, %1 : vector<8x128xf32>
    %c0_3 = arith.constant 0 : index
    %c0_4 = arith.constant 0 : index
    %3 = vector.load %arg3[%c0_3, %c0_4] : memref<8x128xf32, #tpu.memory_space<vmem>>, vector<8x128xf32>
    tpu.vector_store %arg3[%c0_3, %c0_4], %2 {strides = array<i32>} : memref<8x128xf32, #tpu.memory_space<vmem>>, vector<8x128xf32>,
    return
  }
  func.func @transform_0(%arg0: i32) -> (i32, i32) {
    %c0_i32 = arith.constant 0 : i32
    %c0_i32_0 = arith.constant 0 : i32
    %c0_i32_1 = arith.constant 0 : i32
    return %c0_i32, %c0_i32_0 : i32, i32
  }
  func.func @transform_1(%arg0: i32) -> (i32, i32) {
    %c0_i32 = arith.constant 0 : i32
    %c0_i32_0 = arith.constant 0 : i32
    %c0_i32_1 = arith.constant 0 : i32
    return %c0_i32, %c0_i32_0 : i32, i32
  }
  func.func @transform_2(%arg0: i32) -> (i32, i32) {
    %c0_i32 = arith.constant 0 : i32
    %c0_i32_0 = arith.constant 0 : i32
    %c0_i32_1 = arith.constant 0 : i32
    return %c0_i32, %c0_i32_0 : i32, i32
  }
}

module attributes {stable_mosaic.version = 11 : i64} {
  func.func @_qkv_kernel(%arg0: i32, %arg1: i32, %arg2: memref<1x8x32xf32, #tpu.memory_space<vmem>>, %arg3: memref<1x32xf32, #tpu.memory_space<vmem>>, %arg4: memref<1x32xf32, #tpu.memory_space<vmem>>, %arg5: memref<32x96xbf16, #tpu.memory_space<vmem>>, %arg6: memref<1x4x8x8xbf16, #tpu.memory_space<vmem>>, %arg7: memref<1x4x8x8xbf16, #tpu.memory_space<vmem>>, %arg8: memref<1x4x8x8xbf16, #tpu.memory_space<vmem>>) attributes {dimension_semantics = [#tpu.dimension_semantics<parallel>, #tpu.dimension_semantics<parallel>], iteration_bounds = array<i64: 2, 1>, scalar_prefetch = 0 : i64, scratch_operands = 0 : i64, tpu.core_type = #tpu.core_type<tc>, window_params = [{transform_indices = @transform_0, window_bounds = array<i64: 1, 8, 32>}, {pipeline_mode = #tpu.pipeline_mode<synchronous>, transform_indices = @transform_1, window_bounds = array<i64: 1, 32>}, {pipeline_mode = #tpu.pipeline_mode<synchronous>, transform_indices = @transform_2, window_bounds = array<i64: 1, 32>}, {pipeline_mode = #tpu.pipeline_mode<synchronous>, transform_indices = @transform_3, window_bounds = array<i64: 32, 96>}, {transform_indices = @transform_4, window_bounds = array<i64: 1, 4, 8, 8>}, {transform_indices = @transform_5, window_bounds = array<i64: 1, 4, 8, 8>}, {transform_indices = @transform_6, window_bounds = array<i64: 1, 4, 8, 8>}]} {
    %c0 = arith.constant 0 : index
    %c0_0 = arith.constant 0 : index
    %c0_1 = arith.constant 0 : index
    %0 = vector.load %arg2[%c0, %c0_0, %c0_1] : memref<1x8x32xf32, #tpu.memory_space<vmem>>, vector<1x8x32xf32>
    %1 = vector.shape_cast %0 : vector<1x8x32xf32> to vector<8x32xf32>
    %c0_2 = arith.constant 0 : index
    %c0_3 = arith.constant 0 : index
    %2 = vector.load %arg3[%c0_2, %c0_3] : memref<1x32xf32, #tpu.memory_space<vmem>>, vector<1x32xf32>
    %3 = vector.shape_cast %2 : vector<1x32xf32> to vector<32xf32>
    %c0_4 = arith.constant 0 : index
    %c0_5 = arith.constant 0 : index
    %4 = vector.load %arg4[%c0_4, %c0_5] : memref<1x32xf32, #tpu.memory_space<vmem>>, vector<1x32xf32>
    %5 = vector.shape_cast %4 : vector<1x32xf32> to vector<32xf32>
    %cst = arith.constant dense<0.000000e+00> : vector<8xf32>
    %6 = vector.multi_reduction <add>, %1, %cst [1] : vector<8x32xf32> to vector<8xf32>
    %7 = vector.shape_cast %6 : vector<8xf32> to vector<8x1xf32>
    %cst_6 = arith.constant 3.200000e+01 : f32
    %8 = vector.broadcast %cst_6 : f32 to vector<8x1xf32>
    %9 = arith.divf %7, %8 : vector<8x1xf32>
    %10 = vector.broadcast %9 : vector<8x1xf32> to vector<8x32xf32>
    %11 = arith.subf %1, %10 : vector<8x32xf32>
    %12 = arith.mulf %11, %11 : vector<8x32xf32>
    %cst_7 = arith.constant dense<0.000000e+00> : vector<8xf32>
    %13 = vector.multi_reduction <add>, %12, %cst_7 [1] : vector<8x32xf32> to vector<8xf32>
    %14 = vector.shape_cast %13 : vector<8xf32> to vector<8x1xf32>
    %cst_8 = arith.constant 3.200000e+01 : f32
    %15 = vector.broadcast %cst_8 : f32 to vector<8x1xf32>
    %16 = arith.divf %14, %15 : vector<8x1xf32>
    %cst_9 = arith.constant 9.99999974E-6 : f32
    %17 = vector.broadcast %cst_9 : f32 to vector<8x1xf32>
    %18 = arith.addf %16, %17 : vector<8x1xf32>
    %19 = math.rsqrt %18 : vector<8x1xf32>
    %20 = vector.broadcast %19 : vector<8x1xf32> to vector<8x32xf32>
    %21 = arith.mulf %11, %20 : vector<8x32xf32>
    %22 = vector.shape_cast %3 : vector<32xf32> to vector<1x32xf32>
    %23 = vector.broadcast %22 : vector<1x32xf32> to vector<8x32xf32>
    %24 = arith.mulf %21, %23 : vector<8x32xf32>
    %25 = vector.shape_cast %5 : vector<32xf32> to vector<1x32xf32>
    %26 = vector.broadcast %25 : vector<1x32xf32> to vector<8x32xf32>
    %27 = arith.addf %24, %26 : vector<8x32xf32>
    %28 = arith.truncf %27 : vector<8x32xf32> to vector<8x32xbf16>
    %c0_10 = arith.constant 0 : index
    %c0_11 = arith.constant 0 : index
    %29 = vector.load %arg5[%c0_10, %c0_11] : memref<32x96xbf16, #tpu.memory_space<vmem>>, vector<32x96xbf16>
    %cst_12 = arith.constant dense<0.000000e+00> : vector<8x96xf32>
    %30 = tpu.matmul %28, %29, %cst_12 {dimension_numbers = #tpu.dot_dimension_numbers<[1], [0], [0], [1], [0, 0, 1, 1], [], []>} : vector<8x32xbf16>, vector<32x96xbf16>, vector<8x96xf32> -> vector<8x96xf32>
    %31 = vector.extract_strided_slice %30 {offsets = [0, 0], sizes = [8, 8], strides = [1, 1]} : vector<8x96xf32> to vector<8x8xf32>
    %cst_13 = arith.constant 0.353553385 : f32
    %32 = vector.broadcast %cst_13 : f32 to vector<8x8xf32>
    %33 = arith.mulf %31, %32 : vector<8x8xf32>
    %34 = arith.truncf %33 : vector<8x8xf32> to vector<8x8xbf16>
    %c0_14 = arith.constant 0 : index
    %c0_15 = arith.constant 0 : index
    %c0_16 = arith.constant 0 : index
    %c0_17 = arith.constant 0 : index
    %35 = vector.load %arg6[%c0_14, %c0_15, %c0_16, %c0_17] : memref<1x4x8x8xbf16, #tpu.memory_space<vmem>>, vector<1x1x8x8xbf16>
    %36 = vector.shape_cast %35 : vector<1x1x8x8xbf16> to vector<8x8xbf16>
    %37 = vector.shape_cast %34 : vector<8x8xbf16> to vector<1x1x8x8xbf16>
    tpu.vector_store %arg6[%c0_14, %c0_15, %c0_16, %c0_17], %37 {strides = array<i32>} : memref<1x4x8x8xbf16, #tpu.memory_space<vmem>>, vector<1x1x8x8xbf16>,
    %38 = vector.extract_strided_slice %30 {offsets = [0, 32], sizes = [8, 8], strides = [1, 1]} : vector<8x96xf32> to vector<8x8xf32>
    %39 = arith.truncf %38 : vector<8x8xf32> to vector<8x8xbf16>
    %c0_18 = arith.constant 0 : index
    %c0_19 = arith.constant 0 : index
    %c0_20 = arith.constant 0 : index
    %c0_21 = arith.constant 0 : index
    %40 = vector.load %arg7[%c0_18, %c0_19, %c0_20, %c0_21] : memref<1x4x8x8xbf16, #tpu.memory_space<vmem>>, vector<1x1x8x8xbf16>
    %41 = vector.shape_cast %40 : vector<1x1x8x8xbf16> to vector<8x8xbf16>
    %42 = vector.shape_cast %39 : vector<8x8xbf16> to vector<1x1x8x8xbf16>
    tpu.vector_store %arg7[%c0_18, %c0_19, %c0_20, %c0_21], %42 {strides = array<i32>} : memref<1x4x8x8xbf16, #tpu.memory_space<vmem>>, vector<1x1x8x8xbf16>,
    %43 = vector.extract_strided_slice %30 {offsets = [0, 64], sizes = [8, 8], strides = [1, 1]} : vector<8x96xf32> to vector<8x8xf32>
    %44 = arith.truncf %43 : vector<8x8xf32> to vector<8x8xbf16>
    %c0_22 = arith.constant 0 : index
    %c0_23 = arith.constant 0 : index
    %c0_24 = arith.constant 0 : index
    %c0_25 = arith.constant 0 : index
    %45 = vector.load %arg8[%c0_22, %c0_23, %c0_24, %c0_25] : memref<1x4x8x8xbf16, #tpu.memory_space<vmem>>, vector<1x1x8x8xbf16>
    %46 = vector.shape_cast %45 : vector<1x1x8x8xbf16> to vector<8x8xbf16>
    %47 = vector.shape_cast %44 : vector<8x8xbf16> to vector<1x1x8x8xbf16>
    tpu.vector_store %arg8[%c0_22, %c0_23, %c0_24, %c0_25], %47 {strides = array<i32>} : memref<1x4x8x8xbf16, #tpu.memory_space<vmem>>, vector<1x1x8x8xbf16>,
    %48 = vector.extract_strided_slice %30 {offsets = [0, 8], sizes = [8, 8], strides = [1, 1]} : vector<8x96xf32> to vector<8x8xf32>
    %cst_26 = arith.constant 0.353553385 : f32
    %49 = vector.broadcast %cst_26 : f32 to vector<8x8xf32>
    %50 = arith.mulf %48, %49 : vector<8x8xf32>
    %51 = arith.truncf %50 : vector<8x8xf32> to vector<8x8xbf16>
    %c0_27 = arith.constant 0 : index
    %c1 = arith.constant 1 : index
    %c0_28 = arith.constant 0 : index
    %c0_29 = arith.constant 0 : index
    %52 = vector.load %arg6[%c0_27, %c1, %c0_28, %c0_29] : memref<1x4x8x8xbf16, #tpu.memory_space<vmem>>, vector<1x1x8x8xbf16>
    %53 = vector.shape_cast %52 : vector<1x1x8x8xbf16> to vector<8x8xbf16>
    %54 = vector.shape_cast %51 : vector<8x8xbf16> to vector<1x1x8x8xbf16>
    tpu.vector_store %arg6[%c0_27, %c1, %c0_28, %c0_29], %54 {strides = array<i32>} : memref<1x4x8x8xbf16, #tpu.memory_space<vmem>>, vector<1x1x8x8xbf16>,
    %55 = vector.extract_strided_slice %30 {offsets = [0, 40], sizes = [8, 8], strides = [1, 1]} : vector<8x96xf32> to vector<8x8xf32>
    %56 = arith.truncf %55 : vector<8x8xf32> to vector<8x8xbf16>
    %c0_30 = arith.constant 0 : index
    %c1_31 = arith.constant 1 : index
    %c0_32 = arith.constant 0 : index
    %c0_33 = arith.constant 0 : index
    %57 = vector.load %arg7[%c0_30, %c1_31, %c0_32, %c0_33] : memref<1x4x8x8xbf16, #tpu.memory_space<vmem>>, vector<1x1x8x8xbf16>
    %58 = vector.shape_cast %57 : vector<1x1x8x8xbf16> to vector<8x8xbf16>
    %59 = vector.shape_cast %56 : vector<8x8xbf16> to vector<1x1x8x8xbf16>
    tpu.vector_store %arg7[%c0_30, %c1_31, %c0_32, %c0_33], %59 {strides = array<i32>} : memref<1x4x8x8xbf16, #tpu.memory_space<vmem>>, vector<1x1x8x8xbf16>,
    %60 = vector.extract_strided_slice %30 {offsets = [0, 72], sizes = [8, 8], strides = [1, 1]} : vector<8x96xf32> to vector<8x8xf32>
    %61 = arith.truncf %60 : vector<8x8xf32> to vector<8x8xbf16>
    %c0_34 = arith.constant 0 : index
    %c1_35 = arith.constant 1 : index
    %c0_36 = arith.constant 0 : index
    %c0_37 = arith.constant 0 : index
    %62 = vector.load %arg8[%c0_34, %c1_35, %c0_36, %c0_37] : memref<1x4x8x8xbf16, #tpu.memory_space<vmem>>, vector<1x1x8x8xbf16>
    %63 = vector.shape_cast %62 : vector<1x1x8x8xbf16> to vector<8x8xbf16>
    %64 = vector.shape_cast %61 : vector<8x8xbf16> to vector<1x1x8x8xbf16>
    tpu.vector_store %arg8[%c0_34, %c1_35, %c0_36, %c0_37], %64 {strides = array<i32>} : memref<1x4x8x8xbf16, #tpu.memory_space<vmem>>, vector<1x1x8x8xbf16>,
    %65 = vector.extract_strided_slice %30 {offsets = [0, 16], sizes = [8, 8], strides = [1, 1]} : vector<8x96xf32> to vector<8x8xf32>
    %cst_38 = arith.constant 0.353553385 : f32
    %66 = vector.broadcast %cst_38 : f32 to vector<8x8xf32>
    %67 = arith.mulf %65, %66 : vector<8x8xf32>
    %68 = arith.truncf %67 : vector<8x8xf32> to vector<8x8xbf16>
    %c0_39 = arith.constant 0 : index
    %c2 = arith.constant 2 : index
    %c0_40 = arith.constant 0 : index
    %c0_41 = arith.constant 0 : index
    %69 = vector.load %arg6[%c0_39, %c2, %c0_40, %c0_41] : memref<1x4x8x8xbf16, #tpu.memory_space<vmem>>, vector<1x1x8x8xbf16>
    %70 = vector.shape_cast %69 : vector<1x1x8x8xbf16> to vector<8x8xbf16>
    %71 = vector.shape_cast %68 : vector<8x8xbf16> to vector<1x1x8x8xbf16>
    tpu.vector_store %arg6[%c0_39, %c2, %c0_40, %c0_41], %71 {strides = array<i32>} : memref<1x4x8x8xbf16, #tpu.memory_space<vmem>>, vector<1x1x8x8xbf16>,
    %72 = vector.extract_strided_slice %30 {offsets = [0, 48], sizes = [8, 8], strides = [1, 1]} : vector<8x96xf32> to vector<8x8xf32>
    %73 = arith.truncf %72 : vector<8x8xf32> to vector<8x8xbf16>
    %c0_42 = arith.constant 0 : index
    %c2_43 = arith.constant 2 : index
    %c0_44 = arith.constant 0 : index
    %c0_45 = arith.constant 0 : index
    %74 = vector.load %arg7[%c0_42, %c2_43, %c0_44, %c0_45] : memref<1x4x8x8xbf16, #tpu.memory_space<vmem>>, vector<1x1x8x8xbf16>
    %75 = vector.shape_cast %74 : vector<1x1x8x8xbf16> to vector<8x8xbf16>
    %76 = vector.shape_cast %73 : vector<8x8xbf16> to vector<1x1x8x8xbf16>
    tpu.vector_store %arg7[%c0_42, %c2_43, %c0_44, %c0_45], %76 {strides = array<i32>} : memref<1x4x8x8xbf16, #tpu.memory_space<vmem>>, vector<1x1x8x8xbf16>,
    %77 = vector.extract_strided_slice %30 {offsets = [0, 80], sizes = [8, 8], strides = [1, 1]} : vector<8x96xf32> to vector<8x8xf32>
    %78 = arith.truncf %77 : vector<8x8xf32> to vector<8x8xbf16>
    %c0_46 = arith.constant 0 : index
    %c2_47 = arith.constant 2 : index
    %c0_48 = arith.constant 0 : index
    %c0_49 = arith.constant 0 : index
    %79 = vector.load %arg8[%c0_46, %c2_47, %c0_48, %c0_49] : memref<1x4x8x8xbf16, #tpu.memory_space<vmem>>, vector<1x1x8x8xbf16>
    %80 = vector.shape_cast %79 : vector<1x1x8x8xbf16> to vector<8x8xbf16>
    %81 = vector.shape_cast %78 : vector<8x8xbf16> to vector<1x1x8x8xbf16>
    tpu.vector_store %arg8[%c0_46, %c2_47, %c0_48, %c0_49], %81 {strides = array<i32>} : memref<1x4x8x8xbf16, #tpu.memory_space<vmem>>, vector<1x1x8x8xbf16>,
    %82 = vector.extract_strided_slice %30 {offsets = [0, 24], sizes = [8, 8], strides = [1, 1]} : vector<8x96xf32> to vector<8x8xf32>
    %cst_50 = arith.constant 0.353553385 : f32
    %83 = vector.broadcast %cst_50 : f32 to vector<8x8xf32>
    %84 = arith.mulf %82, %83 : vector<8x8xf32>
    %85 = arith.truncf %84 : vector<8x8xf32> to vector<8x8xbf16>
    %c0_51 = arith.constant 0 : index
    %c3 = arith.constant 3 : index
    %c0_52 = arith.constant 0 : index
    %c0_53 = arith.constant 0 : index
    %86 = vector.load %arg6[%c0_51, %c3, %c0_52, %c0_53] : memref<1x4x8x8xbf16, #tpu.memory_space<vmem>>, vector<1x1x8x8xbf16>
    %87 = vector.shape_cast %86 : vector<1x1x8x8xbf16> to vector<8x8xbf16>
    %88 = vector.shape_cast %85 : vector<8x8xbf16> to vector<1x1x8x8xbf16>
    tpu.vector_store %arg6[%c0_51, %c3, %c0_52, %c0_53], %88 {strides = array<i32>} : memref<1x4x8x8xbf16, #tpu.memory_space<vmem>>, vector<1x1x8x8xbf16>,
    %89 = vector.extract_strided_slice %30 {offsets = [0, 56], sizes = [8, 8], strides = [1, 1]} : vector<8x96xf32> to vector<8x8xf32>
    %90 = arith.truncf %89 : vector<8x8xf32> to vector<8x8xbf16>
    %c0_54 = arith.constant 0 : index
    %c3_55 = arith.constant 3 : index
    %c0_56 = arith.constant 0 : index
    %c0_57 = arith.constant 0 : index
    %91 = vector.load %arg7[%c0_54, %c3_55, %c0_56, %c0_57] : memref<1x4x8x8xbf16, #tpu.memory_space<vmem>>, vector<1x1x8x8xbf16>
    %92 = vector.shape_cast %91 : vector<1x1x8x8xbf16> to vector<8x8xbf16>
    %93 = vector.shape_cast %90 : vector<8x8xbf16> to vector<1x1x8x8xbf16>
    tpu.vector_store %arg7[%c0_54, %c3_55, %c0_56, %c0_57], %93 {strides = array<i32>} : memref<1x4x8x8xbf16, #tpu.memory_space<vmem>>, vector<1x1x8x8xbf16>,
    %94 = vector.extract_strided_slice %30 {offsets = [0, 88], sizes = [8, 8], strides = [1, 1]} : vector<8x96xf32> to vector<8x8xf32>
    %95 = arith.truncf %94 : vector<8x8xf32> to vector<8x8xbf16>
    %c0_58 = arith.constant 0 : index
    %c3_59 = arith.constant 3 : index
    %c0_60 = arith.constant 0 : index
    %c0_61 = arith.constant 0 : index
    %96 = vector.load %arg8[%c0_58, %c3_59, %c0_60, %c0_61] : memref<1x4x8x8xbf16, #tpu.memory_space<vmem>>, vector<1x1x8x8xbf16>
    %97 = vector.shape_cast %96 : vector<1x1x8x8xbf16> to vector<8x8xbf16>
    %98 = vector.shape_cast %95 : vector<8x8xbf16> to vector<1x1x8x8xbf16>
    tpu.vector_store %arg8[%c0_58, %c3_59, %c0_60, %c0_61], %98 {strides = array<i32>} : memref<1x4x8x8xbf16, #tpu.memory_space<vmem>>, vector<1x1x8x8xbf16>,
    return
  }
  func.func @transform_0(%arg0: i32, %arg1: i32) -> (i32, i32, i32) {
    %c0_i32 = arith.constant 0 : i32
    %c0_i32_0 = arith.constant 0 : i32
    return %arg0, %arg1, %c0_i32 : i32, i32, i32
  }
  func.func @transform_1(%arg0: i32, %arg1: i32) -> (i32, i32) {
    %c0_i32 = arith.constant 0 : i32
    %c0_i32_0 = arith.constant 0 : i32
    %c0_i32_1 = arith.constant 0 : i32
    return %c0_i32, %c0_i32_0 : i32, i32
  }
  func.func @transform_2(%arg0: i32, %arg1: i32) -> (i32, i32) {
    %c0_i32 = arith.constant 0 : i32
    %c0_i32_0 = arith.constant 0 : i32
    %c0_i32_1 = arith.constant 0 : i32
    return %c0_i32, %c0_i32_0 : i32, i32
  }
  func.func @transform_3(%arg0: i32, %arg1: i32) -> (i32, i32) {
    %c0_i32 = arith.constant 0 : i32
    %c0_i32_0 = arith.constant 0 : i32
    %c0_i32_1 = arith.constant 0 : i32
    return %c0_i32, %c0_i32_0 : i32, i32
  }
  func.func @transform_4(%arg0: i32, %arg1: i32) -> (i32, i32, i32, i32) {
    %c0_i32 = arith.constant 0 : i32
    %c0_i32_0 = arith.constant 0 : i32
    %c0_i32_1 = arith.constant 0 : i32
    return %arg0, %c0_i32, %arg1, %c0_i32_0 : i32, i32, i32, i32
  }
  func.func @transform_5(%arg0: i32, %arg1: i32) -> (i32, i32, i32, i32) {
    %c0_i32 = arith.constant 0 : i32
    %c0_i32_0 = arith.constant 0 : i32
    %c0_i32_1 = arith.constant 0 : i32
    return %arg0, %c0_i32, %arg1, %c0_i32_0 : i32, i32, i32, i32
  }
  func.func @transform_6(%arg0: i32, %arg1: i32) -> (i32, i32, i32, i32) {
    %c0_i32 = arith.constant 0 : i32
    %c0_i32_0 = arith.constant 0 : i32
    %c0_i32_1 = arith.constant 0 : i32
    return %arg0, %c0_i32, %arg1, %c0_i32_0 : i32, i32, i32, i32
  }
}

</mosaic_0001>

<llo_original>
// kernel: tpu_custom_call.1
$region0: #{tpu_custom_call.1}
  #allocation0 [shape = 'u32[]', space=smem, size = 0x4, offset = 0x4, fixed_abs, tag = 'smem constant byte address 0x4 - core index']
  #allocation1 [shape = 'u32[144,128]{1,0:T(1,128)}', space=vmem, size = 0x12000, scoped, tag = 'internal scratch']
  %s0 = inlined_call_operand.hbm [shape: f32[8,128], index: 0, kind: input, shape index: {}]
  %s1 = inlined_call_operand.hbm [shape: f32[8,128], index: 1, kind: input, shape index: {}]
  %s2 = inlined_call_operand.hbm [shape: f32[8,128], index: 2, kind: output, shape index: {}]
  %s3 = sld [smem:[#allocation0]]
  $region49: #{tpu_custom_call.1} parent=0
    _
  %s5 = ssub.s32 1, %s3
  %s6 = scalar_select 0, %s5, %s3
  $region1: #{tpu_custom_call.1} parent=0
    #allocation2 [shape = 'u8[4096]{0}', space=vmem, size = 0x1000, scoped, tag = 'input window, operand 0, single buffered']
    #allocation3 [shape = 's32[2]{0}', space=sflag, size = 0x8, scoped, tag = 'scoped memory for tpu_custom_call.1']
    #allocation4 [shape = 's32[2]{0}', space=sflag, size = 0x8, scoped, tag = 'scoped memory for tpu_custom_call.1']
    #allocation5 [shape = 'u8[4096]{0}', space=vmem, size = 0x1000, scoped, tag = 'input window, operand 1, single buffered']
    #allocation6 [shape = 's32[1]{0}', space=sflag, size = 0x4, scoped, tag = 'scoped memory for tpu_custom_call.1']
    #allocation7 [shape = 'u8[4096]{0}', space=vmem, size = 0x1000, scoped, tag = 'output window, operand 0, single buffered']
    %7 = vsyncpa [#allocation3], 0
    %8 = vsyncpa [#allocation6], 0
    %9 = vsyncpa [#allocation4], 0
    loop: start=0, step=1, limit=4
    $region2: #{tpu_custom_call.1} parent=1 // loop_pre_header
      _
    $region3: #{tpu_custom_call.1} parent=1 // loop_header
      %s11 = sphi 0, %s15
      %p12 = scmp.ge.s32.totalorder %s11, 4
      %s19 = sphi 0, %s19
      %s21 = sphi 0, %s19
      %s22 = sphi 0, %s21
      %s36 = sphi 0, %s22
      %s40 = sphi 0, %s40
      %s42 = sphi 0, %s40
      %s43 = sphi 0, %s42
      %s57 = sphi 0, %s43
      %s61 = sphi 0, %s61
      %s63 = sphi 0, %s61
      %s64 = sphi 0, %s63
      %s78 = sphi 0, %s64
    $region4: #{tpu_custom_call.1} parent=1 // loop_header_branch
      %14 = sbr.rel (%p12) target = $region8
    $region5: #{tpu_custom_call.1} parent=1 // loop_body
      %s16 = ssub.s32 %s11, 1
      %s17 = ssub.s32 %s11, 2
      %s18 = sadd.s32 %s11, 1
      %s20 = sadd.s32 %s19, 1
      %p23 = scmp.eq.s32.totalorder %s11, 1
      %p24 = scmp.ne.s32.totalorder %s19, %s21
      %p25 = scmp.eq.s32.totalorder %s11, 0
      %p26 = por %p24, %p25
      %p27 = scmp.ne.s32.totalorder %s19, %s21
      %p28 = scmp.eq.s32.totalorder %s16, 1
      %p29 = por %p27, %p28
      %p30 = scmp.ne.s32.totalorder %s21, %s22
      %p31 = scmp.eq.s32.totalorder %s16, 0
      %p32 = por %p30, %p31
      %p33 = scmp.ne.s32.totalorder %s21, %s22
      %p34 = scmp.eq.s32.totalorder %s17, 1
      %p35 = por %p33, %p34
      %p37 = scmp.ne.s32.totalorder %s22, %s36
      %p38 = scmp.eq.s32.totalorder %s17, 0
      %p39 = por %p37, %p38
      %s41 = sadd.s32 %s40, 1
      %p44 = scmp.eq.s32.totalorder %s11, 1
      %p45 = scmp.ne.s32.totalorder %s40, %s42
      %p46 = scmp.eq.s32.totalorder %s11, 0
      %p47 = por %p45, %p46
      %p48 = scmp.ne.s32.totalorder %s40, %s42
      %p49 = scmp.eq.s32.totalorder %s16, 1
      %p50 = por %p48, %p49
      %p51 = scmp.ne.s32.totalorder %s42, %s43
      %p52 = scmp.eq.s32.totalorder %s16, 0
      %p53 = por %p51, %p52
      %p54 = scmp.ne.s32.totalorder %s42, %s43
      %p55 = scmp.eq.s32.totalorder %s17, 1
      %p56 = por %p54, %p55
      %p58 = scmp.ne.s32.totalorder %s43, %s57
      %p59 = scmp.eq.s32.totalorder %s17, 0
      %p60 = por %p58, %p59
      %s62 = sadd.s32 %s61, 1
      %p65 = scmp.eq.s32.totalorder %s11, 1
      %p66 = scmp.ne.s32.totalorder %s61, %s63
      %p67 = scmp.eq.s32.totalorder %s11, 0
      %p68 = por %p66, %p67
      %p69 = scmp.ne.s32.totalorder %s61, %s63
      %p70 = scmp.eq.s32.totalorder %s16, 1
      %p71 = por %p69, %p70
      %p72 = scmp.ne.s32.totalorder %s63, %s64
      %p73 = scmp.eq.s32.totalorder %s16, 0
      %p74 = por %p72, %p73
      %p75 = scmp.ne.s32.totalorder %s63, %s64
      %p76 = scmp.eq.s32.totalorder %s17, 1
      %p77 = por %p75, %p76
      %p79 = scmp.ne.s32.totalorder %s64, %s78
      %p80 = scmp.eq.s32.totalorder %s17, 0
      %p81 = por %p79, %p80
      %p82 = scmp.le.s32.totalorder 1, %s11
      %p83 = scmp.lt.s32.totalorder %s11, 3
      %p84 = pnand %p82, %p83
      %p85 = pneg %p84
      // Predicated region
      $region9: #{tpu_custom_call.1} parent=5 // pred_check
        _
      $region10: #{tpu_custom_call.1} parent=5 // pred_check_branch
        %87 = sbr.rel (%p84) target = $region12
      $region11: #{tpu_custom_call.1} parent=5 // pred_region
        %s88 = ssub.s32 %s11, 1
        // Predicated region
        $region13: #{tpu_custom_call.1} parent=11 // pred_check
          %p89 = pneg %p32
        $region14: #{tpu_custom_call.1} parent=11 // pred_check_branch
          %91 = sbr.rel (%p89) target = $region16
        $region15: #{tpu_custom_call.1} parent=11 // pred_region
          %s93 = ssub.s32 128, 128
          %94 = vsyncadd [#allocation3], %s93
          %s96 = sshll.u32 [#allocation2], 4
          %s97 = int_to_ptr.vmem [resolvable:$true] %s96
          %99 = dma.hbm_to_vmem [thread:$0]  %s0, 128, %s97, [#allocation3]
        $region16: #{tpu_custom_call.1} parent=11 // pred_fallthru
          _
        // Predicated region
        $region17: #{tpu_custom_call.1} parent=11 // pred_check
          %p100 = pneg %p53
        $region18: #{tpu_custom_call.1} parent=11 // pred_check_branch
          %102 = sbr.rel (%p100) target = $region20
        $region19: #{tpu_custom_call.1} parent=11 // pred_region
          %s104 = ssub.s32 128, 128
          %105 = vsyncadd [#allocation6], %s104
          %s107 = sshll.u32 [#allocation5], 4
          %s108 = int_to_ptr.vmem [resolvable:$true] %s107
          %110 = dma.hbm_to_vmem [thread:$0]  %s1, 128, %s108, [#allocation6]
        $region20: #{tpu_custom_call.1} parent=11 // pred_fallthru
          _
      $region12: #{tpu_custom_call.1} parent=5 // pred_fallthru
        _
      %p111 = scmp.lt.s32.totalorder %s11, 2
      // Predicated region
      $region21: #{tpu_custom_call.1} parent=5 // pred_check
        %p112 = pneg %p111
      $region22: #{tpu_custom_call.1} parent=5 // pred_check_branch
        %114 = sbr.rel (%p112) target = $region24
      $region23: #{tpu_custom_call.1} parent=5 // pred_region
        _
      $region24: #{tpu_custom_call.1} parent=5 // pred_fallthru
        _
      %p115 = scmp.le.s32.totalorder 1, %s11
      %p116 = scmp.lt.s32.totalorder %s11, 3
      %p117 = pnand %p115, %p116
      %p118 = pneg %p117
      // Predicated region
      $region25: #{tpu_custom_call.1} parent=5 // pred_check
        _
      $region26: #{tpu_custom_call.1} parent=5 // pred_check_branch
        %120 = sbr.rel (%p117) target = $region28
      $region27: #{tpu_custom_call.1} parent=5 // pred_region
        %s121 = ssub.s32 %s11, 1
        // Predicated region
        $region29: #{tpu_custom_call.1} parent=27 // pred_check
          %p122 = pneg %p32
        $region30: #{tpu_custom_call.1} parent=27 // pred_check_branch
          %124 = sbr.rel (%p122) target = $region32
        $region31: #{tpu_custom_call.1} parent=27 // pred_region
          %125 = dma.done [#allocation3], 128
        $region32: #{tpu_custom_call.1} parent=27 // pred_fallthru
          _
        // Predicated region
        $region33: #{tpu_custom_call.1} parent=27 // pred_check
          %p126 = pneg %p53
        $region34: #{tpu_custom_call.1} parent=27 // pred_check_branch
          %128 = sbr.rel (%p126) target = $region36
        $region35: #{tpu_custom_call.1} parent=27 // pred_region
          %129 = dma.done [#allocation6], 128
        $region36: #{tpu_custom_call.1} parent=27 // pred_fallthru
          _
        %p130 = pneg %p32
        %p131 = pneg %p29
        %p132 = pneg %p53
        %p133 = pneg %p50
        %p134 = pneg %p74
        %p135 = pneg %p71
        %v136 = vld [vmem:[#allocation2] sm:$0xff]
        %v137 = vld [vmem:[#allocation5] sm:$0xff]
        %v138 = vadd.f32 %v136, %v137
        %139 = vst [vmem:[#allocation7] sm:$0xff] %v138
        // Predicated region
        $region37: #{tpu_custom_call.1} parent=27 // pred_check
          %p140 = pneg %p71
        $region38: #{tpu_custom_call.1} parent=27 // pred_check_branch
          %142 = sbr.rel (%p140) target = $region40
        $region39: #{tpu_custom_call.1} parent=27 // pred_region
          %s144 = ssub.s32 128, 128
          %145 = vsyncadd [#allocation4], %s144
          %s147 = sshll.u32 [#allocation7], 4
          %s148 = int_to_ptr.vmem [resolvable:$true] %s147
          %150 = dma.vmem_to_hbm [thread:$0]  %s148, 128, %s2, [#allocation4]
        $region40: #{tpu_custom_call.1} parent=27 // pred_fallthru
          _
        // Predicated region
        $region41: #{tpu_custom_call.1} parent=27 // pred_check
          %p151 = pneg %p71
        $region42: #{tpu_custom_call.1} parent=27 // pred_check_branch
          %153 = sbr.rel (%p151) target = $region44
        $region43: #{tpu_custom_call.1} parent=27 // pred_region
          %154 = dma.done [#allocation4], 128
        $region44: #{tpu_custom_call.1} parent=27 // pred_fallthru
          _
      $region28: #{tpu_custom_call.1} parent=5 // pred_fallthru
        _
      %p155 = scmp.le.s32.totalorder 2, %s11
      // Predicated region
      $region45: #{tpu_custom_call.1} parent=5 // pred_check
        %p156 = pneg %p155
      $region46: #{tpu_custom_call.1} parent=5 // pred_check_branch
        %158 = sbr.rel (%p156) target = $region48
      $region47: #{tpu_custom_call.1} parent=5 // pred_region
        %s159 = ssub.s32 %s11, 2
      $region48: #{tpu_custom_call.1} parent=5 // pred_fallthru
        _
    $region6: #{tpu_custom_call.1} parent=1 // loop_footer
      %s15 = sadd.s32 1, %s11
    $region7: #{tpu_custom_call.1} parent=1 // loop_footer_branch
      %10 = sbr.rel target = $region3
    $region8: #{tpu_custom_call.1} parent=1 // loop_exit
      _
    %160 = vsyncpa [#allocation3], 1
    %s161 = scalar_lea.sflag [#allocation3], 1
    %162 = vsyncpa %s161, 1
    %163 = vsyncpa [#allocation6], 1
    %164 = vsyncpa [#allocation4], 1
    %s165 = scalar_lea.sflag [#allocation4], 1
    %166 = vsyncpa %s165, 1

// kernel: tpu_custom_call.1
$region0: #{tpu_custom_call.1}
  #allocation0 [shape = 'u32[]', space=smem, size = 0x4, offset = 0x4, fixed_abs, tag = 'smem constant byte address 0x4 - core index']
  #allocation1 [shape = 'u32[144,128]{1,0:T(1,128)}', space=vmem, size = 0x12000, scoped, tag = 'internal scratch']
  %s0 = inlined_call_operand.hbm [shape: f32[2,8,32], index: 0, kind: input, shape index: {}]
  %s1 = inlined_call_operand.vmem [shape: f32[1,32], index: 1, kind: input, shape index: {}]
  %s2 = inlined_call_operand.vmem [shape: f32[1,32], index: 2, kind: input, shape index: {}]
  %s3 = inlined_call_operand.hbm [shape: bf16[32,96], index: 3, kind: input, shape index: {}]
  %s4 = inlined_call_operand.hbm [shape: bf16[2,4,8,8], index: 4, kind: output, shape index: {0}]
  %s5 = inlined_call_operand.hbm [shape: bf16[2,4,8,8], index: 5, kind: output, shape index: {1}]
  %s6 = inlined_call_operand.hbm [shape: bf16[2,4,8,8], index: 6, kind: output, shape index: {2}]
  %7 = xla_tuple %s4, %s5, %s6
  %s8 = sld [smem:[#allocation0]]
  $region73: #{tpu_custom_call.1} parent=0
    _
  %s10 = ssub.s32 1, %s8
  %s11 = scalar_select 0, %s10, %s8
  $region1: #{tpu_custom_call.1} parent=0
    #allocation2 [shape = 'u8[8192]{0}', space=vmem, size = 0x2000, scoped, tag = 'input window, operand 0']
    #allocation3 [shape = 's32[2]{0}', space=sflag, size = 0x8, scoped, tag = 'scoped memory for tpu_custom_call.1']
    #allocation4 [shape = 's32[2]{0}', space=sflag, size = 0x8, scoped, tag = 'scoped memory for tpu_custom_call.1']
    #allocation5 [shape = 'u8[8192]{0}', space=vmem, size = 0x2000, scoped, tag = 'input window, operand 3, single buffered']
    #allocation6 [shape = 's32[1]{0}', space=sflag, size = 0x4, scoped, tag = 'scoped memory for tpu_custom_call.1']
    #allocation7 [shape = 'u8[16384]{0}', space=vmem, size = 0x4000, scoped, tag = 'output window, operand 0']
    #allocation8 [shape = 'u8[16384]{0}', space=vmem, size = 0x4000, scoped, tag = 'output window, operand 1']
    #allocation9 [shape = 's32[2]{0}', space=sflag, size = 0x8, scoped, tag = 'scoped memory for tpu_custom_call.1']
    #allocation10 [shape = 'u8[16384]{0}', space=vmem, size = 0x4000, scoped, tag = 'output window, operand 2']
    %12 = vsyncpa [#allocation3], 0
    %s13 = scalar_lea.sflag [#allocation3], 1
    %14 = vsyncpa %s13, 0
    %15 = vsyncpa [#allocation6], 0
    %16 = vsyncpa [#allocation4], 0
    %s17 = scalar_lea.sflag [#allocation4], 1
    %18 = vsyncpa %s17, 0
    %19 = vsyncpa [#allocation9], 0
    %s20 = scalar_lea.sflag [#allocation9], 1
    %21 = vsyncpa %s20, 0
    loop: start=0, step=1, limit=4
    $region2: #{tpu_custom_call.1} parent=1 // loop_pre_header
      _
    $region3: #{tpu_custom_call.1} parent=1 // loop_header
      %s23 = sphi 0, %s27
      %p24 = scmp.ge.s32.totalorder %s23, 4
      %s30 = sphi 0, %s42
      %s31 = sphi 0, %s38
      %s32 = sphi 0, %s30
      %s33 = sphi 0, %s31
      %s34 = sphi 0, %s32
      %s35 = sphi 0, %s33
      %s47 = sphi 0, %s49
      %s50 = sphi 0, %s47
      %s51 = sphi 0, %s50
      %s67 = sphi 0, %s51
      %s71 = sphi 0, %s71
      %s73 = sphi 0, %s71
      %s74 = sphi 0, %s73
      %s88 = sphi 0, %s74
      %s92 = sphi 0, %s92
      %s94 = sphi 0, %s92
      %s95 = sphi 0, %s94
      %s109 = sphi 0, %s95
      %s113 = sphi 0, %s113
      %s115 = sphi 0, %s113
      %s116 = sphi 0, %s115
      %s130 = sphi 0, %s116
      %s138 = sphi 0, %s140
      %s141 = sphi 0, %s138
      %s142 = sphi 0, %s141
      %s158 = sphi 0, %s142
      %s166 = sphi 0, %s168
      %s169 = sphi 0, %s166
      %s170 = sphi 0, %s169
      %s186 = sphi 0, %s170
      %s194 = sphi 0, %s196
      %s197 = sphi 0, %s194
      %s198 = sphi 0, %s197
      %s214 = sphi 0, %s198
    $region4: #{tpu_custom_call.1} parent=1 // loop_header_branch
      %26 = sbr.rel (%p24) target = $region8
    $region5: #{tpu_custom_call.1} parent=1 // loop_body
      %s28 = ssub.s32 %s23, 1
      %s29 = ssub.s32 %s23, 2
      %s36 = sadd.s32 1, %s31
      %p37 = scmp.ge.s32.totalorder %s36, 1
      %s38 = scalar_select %p37, 0, %s36
      %s39 = sadd.s32 1, %s30
      %s40 = scalar_select %p37, %s39, %s30
      %p41 = scmp.ge.s32.totalorder %s40, 2
      %s42 = scalar_select %p41, 0, %s40
      %s43 = ssub.s32 %s30, %s42
      %s44 = ssub.s32 %s31, %s38
      %s45 = sor.u32 %s43, %s44
      %p46 = scmp.eq.s32.totalorder %s45, 0
      %s48 = sadd.s32 %s47, 1
      %s49 = scalar_select %p46, %s47, %s48
      %p52 = pneg %p46
      %p53 = scmp.eq.s32.totalorder %s23, 1
      %p54 = por %p52, %p53
      %p55 = scmp.ne.s32.totalorder %s47, %s50
      %p56 = scmp.eq.s32.totalorder %s23, 0
      %p57 = por %p55, %p56
      %p58 = scmp.ne.s32.totalorder %s47, %s50
      %p59 = scmp.eq.s32.totalorder %s28, 1
      %p60 = por %p58, %p59
      %p61 = scmp.ne.s32.totalorder %s50, %s51
      %p62 = scmp.eq.s32.totalorder %s28, 0
      %p63 = por %p61, %p62
      %p64 = scmp.ne.s32.totalorder %s50, %s51
      %p65 = scmp.eq.s32.totalorder %s29, 1
      %p66 = por %p64, %p65
      %p68 = scmp.ne.s32.totalorder %s51, %s67
      %p69 = scmp.eq.s32.totalorder %s29, 0
      %p70 = por %p68, %p69
      %s72 = sadd.s32 %s71, 1
      %p75 = scmp.eq.s32.totalorder %s23, 1
      %p76 = scmp.ne.s32.totalorder %s71, %s73
      %p77 = scmp.eq.s32.totalorder %s23, 0
      %p78 = por %p76, %p77
      %p79 = scmp.ne.s32.totalorder %s71, %s73
      %p80 = scmp.eq.s32.totalorder %s28, 1
      %p81 = por %p79, %p80
      %p82 = scmp.ne.s32.totalorder %s73, %s74
      %p83 = scmp.eq.s32.totalorder %s28, 0
      %p84 = por %p82, %p83
      %p85 = scmp.ne.s32.totalorder %s73, %s74
      %p86 = scmp.eq.s32.totalorder %s29, 1
      %p87 = por %p85, %p86
      %p89 = scmp.ne.s32.totalorder %s74, %s88
      %p90 = scmp.eq.s32.totalorder %s29, 0
      %p91 = por %p89, %p90
      %s93 = sadd.s32 %s92, 1
      %p96 = scmp.eq.s32.totalorder %s23, 1
      %p97 = scmp.ne.s32.totalorder %s92, %s94
      %p98 = scmp.eq.s32.totalorder %s23, 0
      %p99 = por %p97, %p98
      %p100 = scmp.ne.s32.totalorder %s92, %s94
      %p101 = scmp.eq.s32.totalorder %s28, 1
      %p102 = por %p100, %p101
      %p103 = scmp.ne.s32.totalorder %s94, %s95
      %p104 = scmp.eq.s32.totalorder %s28, 0
      %p105 = por %p103, %p104
      %p106 = scmp.ne.s32.totalorder %s94, %s95
      %p107 = scmp.eq.s32.totalorder %s29, 1
      %p108 = por %p106, %p107
      %p110 = scmp.ne.s32.totalorder %s95, %s109
      %p111 = scmp.eq.s32.totalorder %s29, 0
      %p112 = por %p110, %p111
      %s114 = sadd.s32 %s113, 1
      %p117 = scmp.eq.s32.totalorder %s23, 1
      %p118 = scmp.ne.s32.totalorder %s113, %s115
      %p119 = scmp.eq.s32.totalorder %s23, 0
      %p120 = por %p118, %p119
      %p121 = scmp.ne.s32.totalorder %s113, %s115
      %p122 = scmp.eq.s32.totalorder %s28, 1
      %p123 = por %p121, %p122
      %p124 = scmp.ne.s32.totalorder %s115, %s116
      %p125 = scmp.eq.s32.totalorder %s28, 0
      %p126 = por %p124, %p125
      %p127 = scmp.ne.s32.totalorder %s115, %s116
      %p128 = scmp.eq.s32.totalorder %s29, 1
      %p129 = por %p127, %p128
      %p131 = scmp.ne.s32.totalorder %s116, %s130
      %p132 = scmp.eq.s32.totalorder %s29, 0
      %p133 = por %p131, %p132
      %s134 = ssub.s32 %s30, %s42
      %s135 = ssub.s32 %s31, %s38
      %s136 = sor.u32 %s134, %s135
      %p137 = scmp.eq.s32.totalorder %s136, 0
      %s139 = sadd.s32 %s138, 1
      %s140 = scalar_select %p137, %s138, %s139
      %p143 = pneg %p137
      %p144 = scmp.eq.s32.totalorder %s23, 1
      %p145 = por %p143, %p144
      %p146 = scmp.ne.s32.totalorder %s138, %s141
      %p147 = scmp.eq.s32.totalorder %s23, 0
      %p148 = por %p146, %p147
      %p149 = scmp.ne.s32.totalorder %s138, %s141
      %p150 = scmp.eq.s32.totalorder %s28, 1
      %p151 = por %p149, %p150
      %p152 = scmp.ne.s32.totalorder %s141, %s142
      %p153 = scmp.eq.s32.totalorder %s28, 0
      %p154 = por %p152, %p153
      %p155 = scmp.ne.s32.totalorder %s141, %s142
      %p156 = scmp.eq.s32.totalorder %s29, 1
      %p157 = por %p155, %p156
      %p159 = scmp.ne.s32.totalorder %s142, %s158
      %p160 = scmp.eq.s32.totalorder %s29, 0
      %p161 = por %p159, %p160
      %s162 = ssub.s32 %s30, %s42
      %s163 = ssub.s32 %s31, %s38
      %s164 = sor.u32 %s162, %s163
      %p165 = scmp.eq.s32.totalorder %s164, 0
      %s167 = sadd.s32 %s166, 1
      %s168 = scalar_select %p165, %s166, %s167
      %p171 = pneg %p165
      %p172 = scmp.eq.s32.totalorder %s23, 1
      %p173 = por %p171, %p172
      %p174 = scmp.ne.s32.totalorder %s166, %s169
      %p175 = scmp.eq.s32.totalorder %s23, 0
      %p176 = por %p174, %p175
      %p177 = scmp.ne.s32.totalorder %s166, %s169
      %p178 = scmp.eq.s32.totalorder %s28, 1
      %p179 = por %p177, %p178
      %p180 = scmp.ne.s32.totalorder %s169, %s170
      %p181 = scmp.eq.s32.totalorder %s28, 0
      %p182 = por %p180, %p181
      %p183 = scmp.ne.s32.totalorder %s169, %s170
      %p184 = scmp.eq.s32.totalorder %s29, 1
      %p185 = por %p183, %p184
      %p187 = scmp.ne.s32.totalorder %s170, %s186
      %p188 = scmp.eq.s32.totalorder %s29, 0
      %p189 = por %p187, %p188
      %s190 = ssub.s32 %s30, %s42
      %s191 = ssub.s32 %s31, %s38
      %s192 = sor.u32 %s190, %s191
      %p193 = scmp.eq.s32.totalorder %s192, 0
      %s195 = sadd.s32 %s194, 1
      %s196 = scalar_select %p193, %s194, %s195
      %p199 = pneg %p193
      %p200 = scmp.eq.s32.totalorder %s23, 1
      %p201 = por %p199, %p200
      %p202 = scmp.ne.s32.totalorder %s194, %s197
      %p203 = scmp.eq.s32.totalorder %s23, 0
      %p204 = por %p202, %p203
      %p205 = scmp.ne.s32.totalorder %s194, %s197
      %p206 = scmp.eq.s32.totalorder %s28, 1
      %p207 = por %p205, %p206
      %p208 = scmp.ne.s32.totalorder %s197, %s198
      %p209 = scmp.eq.s32.totalorder %s28, 0
      %p210 = por %p208, %p209
      %p211 = scmp.ne.s32.totalorder %s197, %s198
      %p212 = scmp.eq.s32.totalorder %s29, 1
      %p213 = por %p211, %p212
      %p215 = scmp.ne.s32.totalorder %s198, %s214
      %p216 = scmp.eq.s32.totalorder %s29, 0
      %p217 = por %p215, %p216
      %p218 = scmp.le.s32.totalorder 1, %s23
      %p219 = scmp.lt.s32.totalorder %s23, 3
      %p220 = pnand %p218, %p219
      %p221 = pneg %p220
      // Predicated region
      $region9: #{tpu_custom_call.1} parent=5 // pred_check
        _
      $region10: #{tpu_custom_call.1} parent=5 // pred_check_branch
        %223 = sbr.rel (%p220) target = $region12
      $region11: #{tpu_custom_call.1} parent=5 // pred_region
        %s224 = ssub.s32 %s23, 1
        // Predicated region
        $region13: #{tpu_custom_call.1} parent=11 // pred_check
          %p225 = pneg %p84
        $region14: #{tpu_custom_call.1} parent=11 // pred_check_branch
          %227 = sbr.rel (%p225) target = $region16
        $region15: #{tpu_custom_call.1} parent=11 // pred_region
          _
        $region16: #{tpu_custom_call.1} parent=11 // pred_fallthru
          _
        // Predicated region
        $region17: #{tpu_custom_call.1} parent=11 // pred_check
          %p228 = pneg %p105
        $region18: #{tpu_custom_call.1} parent=11 // pred_check_branch
          %230 = sbr.rel (%p228) target = $region20
        $region19: #{tpu_custom_call.1} parent=11 // pred_region
          _
        $region20: #{tpu_custom_call.1} parent=11 // pred_fallthru
          _
        // Predicated region
        $region21: #{tpu_custom_call.1} parent=11 // pred_check
          %p231 = pneg %p126
        $region22: #{tpu_custom_call.1} parent=11 // pred_check_branch
          %233 = sbr.rel (%p231) target = $region24
        $region23: #{tpu_custom_call.1} parent=11 // pred_region
          %s235 = ssub.s32 256, 256
          %236 = vsyncadd [#allocation6], %s235
          %s237 = sshll.u32 [#allocation5], 4
          %s238 = int_to_ptr.vmem [resolvable:$true] %s237
          %243 = dma.hbm_to_vmem [thread:$0]  %s3, 256, %s238, [#allocation6], 64, 64, 4
        $region24: #{tpu_custom_call.1} parent=11 // pred_fallthru
          _
      $region12: #{tpu_custom_call.1} parent=5 // pred_fallthru
        _
      %p244 = scmp.lt.s32.totalorder %s23, 2
      // Predicated region
      $region25: #{tpu_custom_call.1} parent=5 // pred_check
        %p245 = pneg %p244
      $region26: #{tpu_custom_call.1} parent=5 // pred_check_branch
        %247 = sbr.rel (%p245) target = $region28
      $region27: #{tpu_custom_call.1} parent=5 // pred_region
        // Predicated region
        $region29: #{tpu_custom_call.1} parent=27 // pred_check
          %p248 = pneg %p57
        $region30: #{tpu_custom_call.1} parent=27 // pred_check_branch
          %250 = sbr.rel (%p248) target = $region32
        $region31: #{tpu_custom_call.1} parent=27 // pred_region
          %s251 = sand.u32 %s47, 1
          %s252 = scalar_lea.sflag [#allocation3], %s251
          %s253 = sand.u32 %s47, 1
          %s254 = smul.addr %s253, 8
          %s255 = scalar_lea.vmem [#allocation2], %s254
          %s257 = ssub.s32 128, 128
          %258 = vsyncadd %s252, %s257
          %s259 = sadd.s32 %s31, %s30
          %s260 = smul.addr %s259, 128
          %s261 = scalar_lea.hbm %s0, %s260
          %s263 = sshll.u32 %s255, 4
          %s264 = int_to_ptr.vmem [resolvable:$true] %s263
          %266 = dma.hbm_to_vmem [thread:$0]  %s261, 128, %s264, %s252
        $region32: #{tpu_custom_call.1} parent=27 // pred_fallthru
          _
      $region28: #{tpu_custom_call.1} parent=5 // pred_fallthru
        _
      %p267 = scmp.le.s32.totalorder 1, %s23
      %p268 = scmp.lt.s32.totalorder %s23, 3
      %p269 = pnand %p267, %p268
      %p270 = pneg %p269
      // Predicated region
      $region33: #{tpu_custom_call.1} parent=5 // pred_check
        _
      $region34: #{tpu_custom_call.1} parent=5 // pred_check_branch
        %272 = sbr.rel (%p269) target = $region36
      $region35: #{tpu_custom_call.1} parent=5 // pred_region
        %s273 = ssub.s32 %s23, 1
        %s274 = sand.u32 %s50, 1
        %s275 = scalar_lea.sflag [#allocation3], %s274
        %s276 = sand.u32 %s50, 1
        %s277 = smul.addr %s276, 8
        %s278 = scalar_lea.vmem [#allocation2], %s277
        // Predicated region
        $region37: #{tpu_custom_call.1} parent=35 // pred_check
          %p279 = pneg %p63
        $region38: #{tpu_custom_call.1} parent=35 // pred_check_branch
          %281 = sbr.rel (%p279) target = $region40
        $region39: #{tpu_custom_call.1} parent=35 // pred_region
          %282 = dma.done %s275, 128
        $region40: #{tpu_custom_call.1} parent=35 // pred_fallthru
          _
        // Predicated region
        $region41: #{tpu_custom_call.1} parent=35 // pred_check
          %p283 = pneg %p126
        $region42: #{tpu_custom_call.1} parent=35 // pred_check_branch
          %285 = sbr.rel (%p283) target = $region44
        $region43: #{tpu_custom_call.1} parent=35 // pred_region
          %286 = dma.done [#allocation6], 256
        $region44: #{tpu_custom_call.1} parent=35 // pred_fallthru
          _
        %s287 = sand.u32 %s50, 1
        %s288 = scalar_lea.sflag [#allocation3], %s287
        %s289 = sand.u32 %s50, 1
        %s290 = smul.addr %s289, 8
        %s291 = scalar_lea.vmem [#allocation2], %s290
        %p292 = pneg %p63
        %p293 = pneg %p60
        %p294 = pneg %p84
        %p295 = pneg %p81
        %p296 = pneg %p105
        %p297 = pneg %p102
        %p298 = pneg %p126
        %p299 = pneg %p123
        %p300 = pneg %p154
        %p301 = pneg %p151
        %s302 = sand.u32 %s141, 1
        %s303 = scalar_lea.sflag [#allocation4], %s302
        %s304 = sand.u32 %s141, 1
        %s305 = smul.addr %s304, 16
        %s306 = scalar_lea.vmem [#allocation7], %s305
        %p307 = pneg %p182
        %p308 = pneg %p179
        %s309 = sand.u32 %s28, 1
        %s310 = scalar_lea.sflag [#allocation9], %s309
        %s311 = sand.u32 %s169, 1
        %s312 = smul.addr %s311, 16
        %s313 = scalar_lea.vmem [#allocation8], %s312
        %p314 = pneg %p210
        %p315 = pneg %p207
        %s316 = sand.u32 %s28, 1
        %s317 = scalar_lea.sflag [#allocation9], %s316
        %s318 = sand.u32 %s197, 1
        %s319 = smul.addr %s318, 16
        %s320 = scalar_lea.vmem [#allocation10], %s319
        %v322 = vld [vmem:[%s278] sm:$0xff]
        %v323 = vld [vmem:[%s1] sm:$0x1]
        %v324 = vld [vmem:[%s2] sm:$0x1]
        %vm325 = vcmask 261120
        %v326 = vsel %vm325, %v322, 0.0
        %327 = vadd.xlane.f32.xlu0 %v326
        %v328 = vpop.xlane.xlu0 %327
        %v329 = vrcp.pop 32.0
        %v330 = vmul.f32 %v328, %v329
        %v331 = vsub.f32 %v322, %v330
        %v332 = vmul.f32 %v331, %v331
        %v333 = vsel %vm325, %v332, 0.0
        %334 = vadd.xlane.f32.xlu0 %v333
        %v335 = vpop.xlane.xlu0 %334
        %v336 = vmul.f32 %v335, %v329
        %v337 = vadd.f32 %v336, 1e-05
        %v338 = vrsqrt.pop %v337
        %v339 = vmul.f32 %v331, %v338
        %v341 = vlaneseq
        %v342 = vshrl.u32 %v341, 7
        %v343 = vsub.s32 0, %v342
        %v344 = vrot.slane %v323, %v343
        %v346 = vmul.f32 %v339, %v344
        %v348 = vlaneseq
        %v349 = vshrl.u32 %v348, 7
        %v350 = vsub.s32 0, %v349
        %v351 = vrot.slane %v324, %v350
        %v353 = vadd.f32 %v346, %v351
        %v354 = vpack.c.bf16 %v353, %v353
        %v355 = vld [vmem:[#allocation5] sm:$0xf]
        %v356 = vld [vmem:[#allocation5 + $0x4] sm:$0xf]
        %v357 = vld [vmem:[#allocation5 + $0x8] sm:$0xf]
        %v358 = vld [vmem:[#allocation5 + $0xc] sm:$0xf]
        %v363 = vunpack.c.l.b16 %v355
        %v364 = vunpack.c.l.b16 %v356
        %v365 = vunpack.c.l.b16 %v357
        %v366 = vunpack.c.l.b16 %v358
        %v367 = vpack.c.b16 %v364, %v363
        %v368 = vpack.c.b16 %v366, %v365
        %v372 = vsel %vm325, %v354, 0
        %374 = vmatprep.subr.bf16.mxu0 0
        %375 = vmatpush1.bf16.msra.mxu0 %v367
        %376 = vmatprep.subr.bf16.mxu0 0
        %377 = vmatpush1.bf16.msra.mxu0 %v368
        %378 = vmatprep.subr.bf16.mxu0 0
        %379 = vmatpush1.bf16.msra.mxu0 0
        %380 = vmatprep.subr.bf16.mxu0 0
        %381 = vmatpush1.bf16.msra.mxu0 0
        %382 = vmatprep.subr.bf16.mxu0 0
        %383 = vmatpush1.bf16.msra.mxu0 0
        %384 = vmatprep.subr.bf16.mxu0 0
        %385 = vmatpush1.bf16.msra.mxu0 0
        %386 = vmatprep.subr.bf16.mxu0 0
        %387 = vmatpush1.bf16.msra.mxu0 0
        %388 = vmatprep.subr.bf16.mxu0 0
        %389 = vmatpush1.bf16.msra.mxu0 0
        %390 = vmatprep.subr.bf16.mxu0 0
        %391 = vmatpush1.bf16.msra.mxu0 0
        %392 = vmatprep.subr.bf16.mxu0 0
        %393 = vmatpush1.bf16.msra.mxu0 0
        %394 = vmatprep.subr.bf16.mxu0 0
        %395 = vmatpush1.bf16.msra.mxu0 0
        %396 = vmatprep.subr.bf16.mxu0 0
        %397 = vmatpush1.bf16.msra.mxu0 0
        %398 = vmatprep.subr.bf16.mxu0 0
        %399 = vmatpush1.bf16.msra.mxu0 0
        %400 = vmatprep.subr.bf16.mxu0 0
        %401 = vmatpush1.bf16.msra.mxu0 0
        %402 = vmatprep.subr.bf16.mxu0 0
        %403 = vmatpush1.bf16.msra.mxu0 0
        %404 = vmatprep.subr.bf16.mxu0 0
        %405 = vmatpush1.bf16.msra.mxu0 0
        %406 = vmatprep.mubr.bf16.mxu0 0
        %407 = vmatmul.mubr.bf16.gmra.mrb[0].mxu0 %v372
        %v408 = vpop.f32.mrb[0].mxu0
        %v409 = vadd.f32 0.0, %v408
        %v410 = vpop.f32.mrb[0].mxu0
        %v411 = vpop.f32.mrb[0].mxu0
        %v412 = vpop.f32.mrb[0].mxu0
        %413 = vdwg.mxu0
        %v414 = vmul.f32 %v409, 0.35355338
        %v415 = vpack.c.bf16 %v414, %v414
        %vm416 = vcmask 60416
        %417 = vst.msk [vmem:[%s306] sm:$0xf] %vm416, %v415
        %v418 = vpack.c.bf16 %v409, %v409
        %v420 = vunpack.c.l.b16 %v418
        %v421 = vpack.c.b16 %v420, %v420
        %422 = vrot.lane.b32.xlu0 %v421, 96
        %v423 = vpop.permute.xlu0 %422
        %425 = vst.msk [vmem:[%s313] sm:$0xf] %vm416, %v423
        %426 = vrot.lane.b32.xlu0 %v421, 64
        %v427 = vpop.permute.xlu0 %426
        %429 = vst.msk [vmem:[%s320] sm:$0xf] %vm416, %v427
        %v431 = vunpack.c.l.b16 %v415
        %v432 = vpack.c.b16 %v431, %v431
        %433 = vrot.lane.b32.xlu0 %v432, 120
        %v434 = vpop.permute.xlu0 %433
        %s436 = scalar_lea.vmem %s306, 4 [#allocation7]
        %437 = vst.msk [vmem:[%s436] sm:$0xf] %vm416, %v434
        %438 = vrot.lane.b32.xlu0 %v421, 88
        %v439 = vpop.permute.xlu0 %438
        %s441 = scalar_lea.vmem %s313, 4 [#allocation8]
        %442 = vst.msk [vmem:[%s441] sm:$0xf] %vm416, %v439
        %443 = vrot.lane.b32.xlu0 %v421, 56
        %v444 = vpop.permute.xlu0 %443
        %s446 = scalar_lea.vmem %s320, 4 [#allocation10]
        %447 = vst.msk [vmem:[%s446] sm:$0xf] %vm416, %v444
        %448 = vrot.lane.b32.xlu0 %v432, 112
        %v449 = vpop.permute.xlu0 %448
        %s451 = scalar_lea.vmem %s306, 8 [#allocation7]
        %452 = vst.msk [vmem:[%s451] sm:$0xf] %vm416, %v449
        %453 = vrot.lane.b32.xlu0 %v421, 80
        %v454 = vpop.permute.xlu0 %453
        %s456 = scalar_lea.vmem %s313, 8 [#allocation8]
        %457 = vst.msk [vmem:[%s456] sm:$0xf] %vm416, %v454
        %458 = vrot.lane.b32.xlu0 %v421, 48
        %v459 = vpop.permute.xlu0 %458
        %s461 = scalar_lea.vmem %s320, 8 [#allocation10]
        %462 = vst.msk [vmem:[%s461] sm:$0xf] %vm416, %v459
        %463 = vrot.lane.b32.xlu0 %v432, 104
        %v464 = vpop.permute.xlu0 %463
        %s466 = scalar_lea.vmem %s306, 12 [#allocation7]
        %467 = vst.msk [vmem:[%s466] sm:$0xf] %vm416, %v464
        %468 = vrot.lane.b32.xlu0 %v421, 72
        %v469 = vpop.permute.xlu0 %468
        %s471 = scalar_lea.vmem %s313, 12 [#allocation8]
        %472 = vst.msk [vmem:[%s471] sm:$0xf] %vm416, %v469
        %473 = vrot.lane.b32.xlu0 %v421, 40
        %v474 = vpop.permute.xlu0 %473
        %s476 = scalar_lea.vmem %s320, 12 [#allocation10]
        %477 = vst.msk [vmem:[%s476] sm:$0xf] %vm416, %v474
        %s478 = sand.u32 %s141, 1
        %s479 = scalar_lea.sflag [#allocation4], %s478
        %s480 = sand.u32 %s141, 1
        %s481 = smul.addr %s480, 16
        %s482 = scalar_lea.vmem [#allocation7], %s481
        %s483 = sand.u32 %s28, 1
        %s484 = scalar_lea.sflag [#allocation9], %s483
        %s485 = sand.u32 %s169, 1
        %s486 = smul.addr %s485, 16
        %s487 = scalar_lea.vmem [#allocation8], %s486
        %s488 = sand.u32 %s28, 1
        %s489 = scalar_lea.sflag [#allocation9], %s488
        %s490 = sand.u32 %s197, 1
        %s491 = smul.addr %s490, 16
        %s492 = scalar_lea.vmem [#allocation10], %s491
        // Predicated region
        $region45: #{tpu_custom_call.1} parent=35 // pred_check
          %p493 = pneg %p151
        $region46: #{tpu_custom_call.1} parent=35 // pred_check_branch
          %495 = sbr.rel (%p493) target = $region48
        $region47: #{tpu_custom_call.1} parent=35 // pred_region
          %s497 = ssub.s32 256, 256
          %498 = vsyncadd %s479, %s497
          %s499 = smul.addr %s32, 4
          %s500 = sadd.s32 %s33, %s499
          %s501 = smul.addr %s500, 64
          %s502 = scalar_lea.hbm %s4, %s501
          %s503 = sshll.u32 %s482, 4
          %s504 = int_to_ptr.vmem [resolvable:$true] %s503
          %509 = dma.vmem_to_hbm [thread:$0]  %s504, 256, %s502, %s479, 64, 64, 4
        $region48: #{tpu_custom_call.1} parent=35 // pred_fallthru
          _
        // Predicated region
        $region49: #{tpu_custom_call.1} parent=35 // pred_check
          %p510 = pneg %p179
        $region50: #{tpu_custom_call.1} parent=35 // pred_check_branch
          %512 = sbr.rel (%p510) target = $region52
        $region51: #{tpu_custom_call.1} parent=35 // pred_region
          %s514 = ssub.s32 256, 256
          %515 = vsyncadd %s484, %s514
          %s516 = smul.addr %s32, 4
          %s517 = sadd.s32 %s33, %s516
          %s518 = smul.addr %s517, 64
          %s519 = scalar_lea.hbm %s5, %s518
          %s520 = sshll.u32 %s487, 4
          %s521 = int_to_ptr.vmem [resolvable:$true] %s520
          %526 = dma.vmem_to_hbm [thread:$0]  %s521, 256, %s519, %s484, 64, 64, 4
        $region52: #{tpu_custom_call.1} parent=35 // pred_fallthru
          _
        // Predicated region
        $region53: #{tpu_custom_call.1} parent=35 // pred_check
          %p527 = pneg %p207
        $region54: #{tpu_custom_call.1} parent=35 // pred_check_branch
          %529 = sbr.rel (%p527) target = $region56
        $region55: #{tpu_custom_call.1} parent=35 // pred_region
          %s531 = ssub.s32 256, 256
          %532 = vsyncadd %s489, %s531
          %s533 = smul.addr %s32, 4
          %s534 = sadd.s32 %s33, %s533
          %s535 = smul.addr %s534, 64
          %s536 = scalar_lea.hbm %s6, %s535
          %s537 = sshll.u32 %s492, 4
          %s538 = int_to_ptr.vmem [resolvable:$true] %s537
          %543 = dma.vmem_to_hbm [thread:$0]  %s538, 256, %s536, %s489, 64, 64, 4
        $region56: #{tpu_custom_call.1} parent=35 // pred_fallthru
          _
      $region36: #{tpu_custom_call.1} parent=5 // pred_fallthru
        _
      %p544 = scmp.le.s32.totalorder 2, %s23
      // Predicated region
      $region57: #{tpu_custom_call.1} parent=5 // pred_check
        %p545 = pneg %p544
      $region58: #{tpu_custom_call.1} parent=5 // pred_check_branch
        %547 = sbr.rel (%p545) target = $region60
      $region59: #{tpu_custom_call.1} parent=5 // pred_region
        %s548 = ssub.s32 %s23, 2
        // Predicated region
        $region61: #{tpu_custom_call.1} parent=59 // pred_check
          %p549 = pneg %p157
        $region62: #{tpu_custom_call.1} parent=59 // pred_check_branch
          %551 = sbr.rel (%p549) target = $region64
        $region63: #{tpu_custom_call.1} parent=59 // pred_region
          %s552 = sand.u32 %s142, 1
          %s553 = scalar_lea.sflag [#allocation4], %s552
          %s554 = sand.u32 %s142, 1
          %s555 = smul.addr %s554, 16
          %s556 = scalar_lea.vmem [#allocation7], %s555
          %557 = dma.done %s553, 256
        $region64: #{tpu_custom_call.1} parent=59 // pred_fallthru
          _
        // Predicated region
        $region65: #{tpu_custom_call.1} parent=59 // pred_check
          %p558 = pneg %p185
        $region66: #{tpu_custom_call.1} parent=59 // pred_check_branch
          %560 = sbr.rel (%p558) target = $region68
        $region67: #{tpu_custom_call.1} parent=59 // pred_region
          %s561 = sand.u32 %s29, 1
          %s562 = scalar_lea.sflag [#allocation9], %s561
          %s563 = sand.u32 %s170, 1
          %s564 = smul.addr %s563, 16
          %s565 = scalar_lea.vmem [#allocation8], %s564
          %566 = dma.done %s562, 256
        $region68: #{tpu_custom_call.1} parent=59 // pred_fallthru
          _
        // Predicated region
        $region69: #{tpu_custom_call.1} parent=59 // pred_check
          %p567 = pneg %p213
        $region70: #{tpu_custom_call.1} parent=59 // pred_check_branch
          %569 = sbr.rel (%p567) target = $region72
        $region71: #{tpu_custom_call.1} parent=59 // pred_region
          %s570 = sand.u32 %s29, 1
          %s571 = scalar_lea.sflag [#allocation9], %s570
          %s572 = sand.u32 %s198, 1
          %s573 = smul.addr %s572, 16
          %s574 = scalar_lea.vmem [#allocation10], %s573
          %575 = dma.done %s571, 256
        $region72: #{tpu_custom_call.1} parent=59 // pred_fallthru
          _
      $region60: #{tpu_custom_call.1} parent=5 // pred_fallthru
        _
    $region6: #{tpu_custom_call.1} parent=1 // loop_footer
      %s27 = sadd.s32 1, %s23
    $region7: #{tpu_custom_call.1} parent=1 // loop_footer_branch
      %22 = sbr.rel target = $region3
    $region8: #{tpu_custom_call.1} parent=1 // loop_exit
      _
    %576 = vsyncpa [#allocation3], 1
    %s577 = scalar_lea.sflag [#allocation3], 1
    %578 = vsyncpa %s577, 1
    %579 = vsyncpa [#allocation6], 1
    %580 = vsyncpa [#allocation4], 1
    %s581 = scalar_lea.sflag [#allocation4], 1
    %582 = vsyncpa %s581, 1
    %583 = vsyncpa [#allocation9], 1
    %s584 = scalar_lea.sflag [#allocation9], 1
    %585 = vsyncpa %s584, 1

</llo_original>
